<compile_context>
chip_gen: v7x
topology: tpu7x:2x2x1
jax: 0.10.0
libtpu: 0.0.40
codegen_flags: <defaults>
</compile_context>

<pallas_src>
import functools

import jax
import jax.numpy as jnp
from jax.experimental import pallas as pl
from jax.experimental.pallas import tpu as pltpu


def _round_up(x, m):
    return ((x + m - 1) // m) * m


def _round_down(x, m):
    return (x // m) * m


def _vmem_capacity_bytes():
    """Per-TensorCore VMEM capacity; conservative v7x default if query fails."""
    try:
        info = pltpu.get_tpu_info()
        cap = int(getattr(info, "vmem_capacity_bytes", 0))
        if cap > 0:
            return cap
    except Exception:
        pass
    return 64 * 1024 * 1024  # v7x per-TC (smallest of v5e/v6e/v7x)


def _layernorm_kernel(x_ref, alpha_ref, bias_ref, o_ref, *, eps, features):
    # Standard path (F >= 128 or non-packable): per-row XLU reduction.
    # Two-pass (centered) variance matches torch.std numerics; the extra sweep
    # is hidden under HBM traffic on this memory-bound kernel.
    x = x_ref[...].astype(jnp.float32)
    f = jnp.float32(features)
    mean = jnp.sum(x, axis=-1, keepdims=True) / f
    xc = x - mean
    var = jnp.sum(xc * xc, axis=-1, keepdims=True) / (f - 1.0)
    std = jnp.sqrt(var)
    # Reference divides by (std + eps), not sqrt(var + eps). EUP reciprocal slot
    # is otherwise idle here.
    inv = pl.reciprocal(std + jnp.float32(eps), approx=False)
    y = xc * inv * alpha_ref[...].astype(jnp.float32) + bias_ref[...].astype(jnp.float32)
    o_ref[...] = y.astype(o_ref.dtype)


def _layernorm_packed_kernel(x_ref, alpha_ref, bias_ref, mask_ref, o_ref, *,
                             eps, features):
    # Lane-dense path: each kernel row holds k = W // features original rows.
    # mask_ref is a (W, W) block-diagonal 0/1 matrix: x @ mask gives every lane
    # the sum of its own group, already broadcast back across the group, so the
    # whole reduction runs on the (idle) MXU and stores stay full-width vst.
    x = x_ref[...].astype(jnp.float32)
    m = mask_ref[...]
    f = jnp.float32(features)
    s1 = jnp.dot(x, m, preferred_element_type=jnp.float32)
    mean = s1 / f
    xc = x - mean
    s2 = jnp.dot(xc * xc, m, preferred_element_type=jnp.float32)
    var = s2 / (f - 1.0)
    std = jnp.sqrt(var)
    inv = pl.reciprocal(std + jnp.float32(eps), approx=False)
    y = xc * inv * alpha_ref[...].astype(jnp.float32) + bias_ref[...].astype(jnp.float32)
    o_ref[...] = y.astype(o_ref.dtype)


def layer_normalization(x, alpha, bias, *, eps=1e-6, tile_rows=None):
    """x: (..., features). alpha, bias: (features,).

    Memory-bound LayerNorm: generation-aware VMEM-budgeted row tiles, >=~8 grid
    steps when possible (keeps the pipeline full and both v7x TensorCores busy),
    resident (1, F) params, lane-dense packing for small feature dims.
    """
    orig_shape = x.shape
    features = orig_shape[-1]
    rows = 1
    for s in orig_shape[:-1]:
        rows *= s
    # NOTE: features == 1 yields NaN (N-1 == 0), same as torch.std on one element.

    itemsize = jnp.dtype(x.dtype).itemsize
    # Sublane packing: f32 -> 8 rows/vreg, bf16 -> 16, int8/fp8 -> 32.
    row_multiple = {4: 8, 2: 16, 1: 32}.get(itemsize, 8)

    # Lane-dense packing for small feature dims.
    pack = 1
    if 1 < features < 128 and 128 % features == 0:
        k = 128 // features
        if rows % k == 0:
            pack = k
    use_packed = pack > 1

    W = features * pack      # lane width seen by the kernel
    krows = rows // pack     # rows seen by the kernel

    x2d = x.reshape(krows, W)
    if use_packed:
        alpha2d = jnp.tile(alpha.reshape(-1), pack).reshape(1, W)
        bias2d = jnp.tile(bias.reshape(-1), pack).reshape(1, W)
        gid = jnp.arange(W, dtype=jnp.int32) // features
        group_mask = (gid[:, None] == gid[None, :]).astype(jnp.float32)
    else:
        alpha2d = alpha.reshape(1, W)
        bias2d = bias.reshape(1, W)
        group_mask = None

    # Generation-aware VMEM sizing (v7x: 64 MiB/TC, v5e/v6e: 128 MiB).
    vmem_cap = _vmem_capacity_bytes()
    vmem_limit = min(int(vmem_cap * 0.70), 96 * 1024 * 1024)
    vmem_budget = int(vmem_limit * 0.75)

    # Per tile row: double-buffered input + output tiles plus ~4 f32-wide
    # temporaries (x.astype(f32), centered copy, squared operand, pre-cast y).
    bytes_per_row = 2 * 2 * W * itemsize + 4 * W * 4
    # TODO(synk): add a feature-axis ("arbitrary") grid dimension for feature
    # dims so large that even `row_multiple` rows exceed the VMEM budget.

    if tile_rows is None:
        tile_rows = max(row_multiple, vmem_budget // bytes_per_row)

    if krows <= row_multiple:
        # One block covering the whole array (block dim == array dim is legal).
        tile_rows = krows
    else:
        # Aim for >= ~8 grid steps (>= 4 per TensorCore on a 2-TC v7x chip) so
        # the software pipeline always has something to double-buffer, while
        # keeping each input tile >= ~1 MiB so DMA efficiency stays high.
        target_steps = 8
        floor_rows = max(row_multiple,
                         _round_up(pl.cdiv(1 << 20, max(1, W * itemsize)),
                                   row_multiple))
        desired = max(_round_up(pl.cdiv(krows, target_steps), row_multiple),
                      floor_rows)
        tile_rows = min(tile_rows, desired)
        tile_rows = max(row_multiple, _round_down(tile_rows, row_multiple))
        tile_rows = min(tile_rows, max(row_multiple,
                                       _round_down(krows, row_multiple)))
        # Keep the step count even so both v7x TensorCores get equal work.
        n_steps = pl.cdiv(krows, tile_rows)
        if n_steps > 1 and n_steps % 2 == 1:
            tile_rows = max(row_multiple,
                            _round_up(pl.cdiv(krows, n_steps + 1), row_multiple))

    grid = (pl.cdiv(krows, tile_rows),)

    in_specs = [
        pl.BlockSpec((tile_rows, W), lambda i: (i, 0)),
        pl.BlockSpec((1, W), lambda i: (0, 0)),   # alpha stays resident
        pl.BlockSpec((1, W), lambda i: (0, 0)),   # bias stays resident
    ]
    args = (x2d, alpha2d, bias2d)
    if use_packed:
        in_specs.append(pl.BlockSpec((W, W), lambda i: (0, 0)))  # group mask, resident
        args = args + (group_mask,)
        kernel = functools.partial(_layernorm_packed_kernel, eps=float(eps),
                                   features=features)
    else:
        kernel = functools.partial(_layernorm_kernel, eps=float(eps),
                                   features=features)

    bytes_accessed = 2 * rows * features * itemsize + 2 * features * 4
    cost = pl.CostEstimate(
        flops=int(8 * rows * features
                  + (2 * krows * W * W * 2 if use_packed else 0)),
        transcendentals=int(2 * rows),
        bytes_accessed=int(bytes_accessed),
    )

    out = pl.pallas_call(
        kernel,
        out_shape=jax.ShapeDtypeStruct((krows, W), x.dtype),
        grid_spec=pltpu.PrefetchScalarGridSpec(
            num_scalar_prefetch=0,
            grid=grid,
            in_specs=in_specs,
            out_specs=pl.BlockSpec((tile_rows, W), lambda i: (i, 0)),
        ),
        compiler_params=pltpu.CompilerParams(
            dimension_semantics=("parallel",),
            vmem_limit_bytes=int(vmem_limit),
        ),
        cost_estimate=cost,
    )(*args)

    return out.reshape(orig_shape)


if __name__ == "__main__":
    batch, seq, hidden = 2, 8, 32
    key = jax.random.PRNGKey(0)
    k_small, k_wide = jax.random.split(key)

    def ref_ln(x, alpha, bias, eps=1e-6):
        mean = jnp.mean(x, axis=-1, keepdims=True)
        std = jnp.std(x, axis=-1, keepdims=True, ddof=1)
        return alpha * (x - mean) / (std + eps) + bias

    # Small-F case (F=32 < 128): exercises the lane-dense packed path.
    x = jax.random.normal(k_small, (batch, seq, hidden), dtype=jnp.float32)
    alpha = jnp.ones((hidden,), dtype=jnp.float32)
    bias = jnp.zeros((hidden,), dtype=jnp.float32)
    y = jax.block_until_ready(layer_normalization(x, alpha, bias, eps=1e-6))
    assert jnp.allclose(y, ref_ln(x, alpha, bias), atol=1e-4, rtol=1e-4), \
        "packed-path mismatch vs reference"

    # Wide-F case (F=128): exercises the standard row-reduction path.
    hidden2 = 128
    x2 = jax.random.normal(k_wide, (batch, seq, hidden2), dtype=jnp.float32)
    alpha2 = jnp.full((hidden2,), 1.5, dtype=jnp.float32)
    bias2 = jnp.full((hidden2,), 0.25, dtype=jnp.float32)
    y2 = jax.block_until_ready(layer_normalization(x2, alpha2, bias2, eps=1e-6))
    assert jnp.allclose(y2, ref_ln(x2, alpha2, bias2), atol=1e-4, rtol=1e-4), \
        "standard-path mismatch vs reference"

    print("KERNEL_OK")
</pallas_src>

<mosaic_0001>
module attributes {stable_mosaic.version = 11 : i64} {
  func.func @_layernorm_packed_kernel(%arg0: i32, %arg1: memref<4x128xf32, #tpu.memory_space<vmem>>, %arg2: memref<1x128xf32, #tpu.memory_space<vmem>>, %arg3: memref<1x128xf32, #tpu.memory_space<vmem>>, %arg4: memref<128x128xf32, #tpu.memory_space<vmem>>, %arg5: memref<4x128xf32, #tpu.memory_space<vmem>>) attributes {dimension_semantics = [#tpu.dimension_semantics<parallel>], iteration_bounds = array<i64: 1>, scalar_prefetch = 0 : i64, scratch_operands = 0 : i64, tpu.core_type = #tpu.core_type<tc>, window_params = [{transform_indices = @transform_0, window_bounds = array<i64: 4, 128>}, {pipeline_mode = #tpu.pipeline_mode<synchronous>, transform_indices = @transform_1, window_bounds = array<i64: 1, 128>}, {pipeline_mode = #tpu.pipeline_mode<synchronous>, transform_indices = @transform_2, window_bounds = array<i64: 1, 128>}, {pipeline_mode = #tpu.pipeline_mode<synchronous>, transform_indices = @transform_3, window_bounds = array<i64: 128, 128>}, {transform_indices = @transform_4, window_bounds = array<i64: 4, 128>}]} {
    %c0 = arith.constant 0 : index
    %c0_0 = arith.constant 0 : index
    %0 = vector.load %arg1[%c0, %c0_0] : memref<4x128xf32, #tpu.memory_space<vmem>>, vector<4x128xf32>
    %c0_1 = arith.constant 0 : index
    %c0_2 = arith.constant 0 : index
    %1 = vector.load %arg4[%c0_1, %c0_2] : memref<128x128xf32, #tpu.memory_space<vmem>>, vector<128x128xf32>
    %cst = arith.constant dense<0.000000e+00> : vector<4x128xf32>
    %2 = tpu.matmul %0, %1, %cst {dimension_numbers = #tpu.dot_dimension_numbers<[1], [0], [0], [1], [0, 0, 1, 1], [], []>} : vector<4x128xf32>, vector<128x128xf32>, vector<4x128xf32> -> vector<4x128xf32>
    %cst_3 = arith.constant 3.200000e+01 : f32
    %3 = vector.broadcast %cst_3 : f32 to vector<4x128xf32>
    %4 = arith.divf %2, %3 : vector<4x128xf32>
    %5 = arith.subf %0, %4 : vector<4x128xf32>
    %6 = arith.mulf %5, %5 : vector<4x128xf32>
    %cst_4 = arith.constant dense<0.000000e+00> : vector<4x128xf32>
    %7 = tpu.matmul %6, %1, %cst_4 {dimension_numbers = #tpu.dot_dimension_numbers<[1], [0], [0], [1], [0, 0, 1, 1], [], []>} : vector<4x128xf32>, vector<128x128xf32>, vector<4x128xf32> -> vector<4x128xf32>
    %cst_5 = arith.constant 3.200000e+01 : f32
    %cst_6 = arith.constant 1.000000e+00 : f32
    %8 = arith.subf %cst_5, %cst_6 : f32
    %9 = vector.broadcast %8 : f32 to vector<4x128xf32>
    %10 = arith.divf %7, %9 : vector<4x128xf32>
    %11 = math.sqrt %10 : vector<4x128xf32>
    %cst_7 = arith.constant 9.99999997E-7 : f32
    %12 = vector.broadcast %cst_7 : f32 to vector<4x128xf32>
    %13 = arith.addf %11, %12 : vector<4x128xf32>
    %14 = tpu.reciprocal %13 : vector<4x128xf32> -> vector<4x128xf32>
    %15 = arith.mulf %5, %14 : vector<4x128xf32>
    %c0_8 = arith.constant 0 : index
    %c0_9 = arith.constant 0 : index
    %16 = vector.load %arg2[%c0_8, %c0_9] : memref<1x128xf32, #tpu.memory_space<vmem>>, vector<1x128xf32>
    %17 = vector.broadcast %16 : vector<1x128xf32> to vector<4x128xf32>
    %18 = arith.mulf %15, %17 : vector<4x128xf32>
    %c0_10 = arith.constant 0 : index
    %c0_11 = arith.constant 0 : index
    %19 = vector.load %arg3[%c0_10, %c0_11] : memref<1x128xf32, #tpu.memory_space<vmem>>, vector<1x128xf32>
    %20 = vector.broadcast %19 : vector<1x128xf32> to vector<4x128xf32>
    %21 = arith.addf %18, %20 : vector<4x128xf32>
    %c0_12 = arith.constant 0 : index
    %c0_13 = arith.constant 0 : index
    %22 = vector.load %arg5[%c0_12, %c0_13] : memref<4x128xf32, #tpu.memory_space<vmem>>, vector<4x128xf32>
    tpu.vector_store %arg5[%c0_12, %c0_13], %21 {strides = array<i32>} : memref<4x128xf32, #tpu.memory_space<vmem>>, vector<4x128xf32>,
    return
  }
  func.func @transform_0(%arg0: i32) -> (i32, i32) {
    %c0_i32 = arith.constant 0 : i32
    %c0_i32_0 = arith.constant 0 : i32
    return %arg0, %c0_i32 : i32, i32
  }
  func.func @transform_1(%arg0: i32) -> (i32, i32) {
    %c0_i32 = arith.constant 0 : i32
    %c0_i32_0 = arith.constant 0 : i32
    %c0_i32_1 = arith.constant 0 : i32
    return %c0_i32, %c0_i32_0 : i32, i32
  }
  func.func @transform_2(%arg0: i32) -> (i32, i32) {
    %c0_i32 = arith.constant 0 : i32
    %c0_i32_0 = arith.constant 0 : i32
    %c0_i32_1 = arith.constant 0 : i32
    return %c0_i32, %c0_i32_0 : i32, i32
  }
  func.func @transform_3(%arg0: i32) -> (i32, i32) {
    %c0_i32 = arith.constant 0 : i32
    %c0_i32_0 = arith.constant 0 : i32
    %c0_i32_1 = arith.constant 0 : i32
    return %c0_i32, %c0_i32_0 : i32, i32
  }
  func.func @transform_4(%arg0: i32) -> (i32, i32) {
    %c0_i32 = arith.constant 0 : i32
    %c0_i32_0 = arith.constant 0 : i32
    return %arg0, %c0_i32 : i32, i32
  }
}

</mosaic_0001>

<llo_original>
// kernel: tpu_custom_call.1
$region0: #{tpu_custom_call.1}
  #allocation0 [shape = 'u32[]', space=smem, size = 0x4, offset = 0x4, fixed_abs, tag = 'smem constant byte address 0x4 - core index']
  #allocation1 [shape = 'u32[144,128]{1,0:T(1,128)}', space=vmem, size = 0x12000, scoped, tag = 'internal scratch']
  %s0 = inlined_call_operand.hbm [shape: f32[4,128], index: 0, kind: input, shape index: {}]
  %s1 = inlined_call_operand.vmem [shape: f32[1,128], index: 1, kind: input, shape index: {}]
  %s2 = inlined_call_operand.vmem [shape: f32[1,128], index: 2, kind: input, shape index: {}]
  %s3 = inlined_call_operand.hbm [shape: f32[128,128], index: 3, kind: input, shape index: {}]
  %s4 = inlined_call_operand.hbm [shape: f32[4,128], index: 4, kind: output, shape index: {}]
  %s5 = sld [smem:[#allocation0]]
  $region34: #{tpu_custom_call.1} parent=0
    _
  %s7 = ssub.s32 1, %s5
  %s8 = scalar_select 0, %s7, %s5
  $region1: #{tpu_custom_call.1} parent=0
    #allocation2 [shape = 'u8[2048]{0}', space=vmem, size = 0x800, scoped, tag = 'input window, operand 0, single buffered']
    #allocation3 [shape = 's32[1]{0}', space=sflag, size = 0x4, scoped, tag = 'scoped memory for tpu_custom_call.1']
    #allocation4 [shape = 's32[1]{0}', space=sflag, size = 0x4, scoped, tag = 'scoped memory for tpu_custom_call.1']
    #allocation5 [shape = 'u8[65536]{0}', space=vmem, size = 0x10000, scoped, tag = 'input window, operand 3, single buffered']
    #allocation6 [shape = 's32[1]{0}', space=sflag, size = 0x4, scoped, tag = 'scoped memory for tpu_custom_call.1']
    #allocation7 [shape = 'u8[2048]{0}', space=vmem, size = 0x800, scoped, tag = 'output window, operand 0, single buffered']
    %9 = vsyncpa [#allocation3], 0
    %10 = vsyncpa [#allocation6], 0
    %11 = vsyncpa [#allocation4], 0
    // Predicated region
    $region2: #{tpu_custom_call.1} parent=1 // pred_check
      _
    $region3: #{tpu_custom_call.1} parent=1 // pred_check_branch
      %13 = sbr.rel (0) target = $region5
    $region4: #{tpu_custom_call.1} parent=1 // pred_region
      %s15 = ssub.s32 64, 64
      %16 = vsyncadd [#allocation3], %s15
      %s18 = sshll.u32 [#allocation2], 4
      %s19 = int_to_ptr.vmem [resolvable:$true] %s18
      %21 = dma.hbm_to_vmem [thread:$0]  %s0, 64, %s19, [#allocation3]
    $region5: #{tpu_custom_call.1} parent=1 // pred_fallthru
      _
    // Predicated region
    $region6: #{tpu_custom_call.1} parent=1 // pred_check
      _
    $region7: #{tpu_custom_call.1} parent=1 // pred_check_branch
      %23 = sbr.rel (0) target = $region9
    $region8: #{tpu_custom_call.1} parent=1 // pred_region
      _
    $region9: #{tpu_custom_call.1} parent=1 // pred_fallthru
      _
    // Predicated region
    $region10: #{tpu_custom_call.1} parent=1 // pred_check
      _
    $region11: #{tpu_custom_call.1} parent=1 // pred_check_branch
      %25 = sbr.rel (0) target = $region13
    $region12: #{tpu_custom_call.1} parent=1 // pred_region
      _
    $region13: #{tpu_custom_call.1} parent=1 // pred_fallthru
      _
    // Predicated region
    $region14: #{tpu_custom_call.1} parent=1 // pred_check
      _
    $region15: #{tpu_custom_call.1} parent=1 // pred_check_branch
      %27 = sbr.rel (0) target = $region17
    $region16: #{tpu_custom_call.1} parent=1 // pred_region
      %s29 = ssub.s32 2048, 2048
      %30 = vsyncadd [#allocation6], %s29
      %s31 = sshll.u32 [#allocation5], 4
      %s32 = int_to_ptr.vmem [resolvable:$true] %s31
      %37 = dma.hbm_to_vmem [thread:$0]  %s3, 2048, %s32, [#allocation6], 128, 128, 8
    $region17: #{tpu_custom_call.1} parent=1 // pred_fallthru
      _
    // Predicated region
    $region18: #{tpu_custom_call.1} parent=1 // pred_check
      _
    $region19: #{tpu_custom_call.1} parent=1 // pred_check_branch
      %39 = sbr.rel (0) target = $region21
    $region20: #{tpu_custom_call.1} parent=1 // pred_region
      %40 = dma.done [#allocation3], 64
    $region21: #{tpu_custom_call.1} parent=1 // pred_fallthru
      _
    // Predicated region
    $region22: #{tpu_custom_call.1} parent=1 // pred_check
      _
    $region23: #{tpu_custom_call.1} parent=1 // pred_check_branch
      %42 = sbr.rel (0) target = $region25
    $region24: #{tpu_custom_call.1} parent=1 // pred_region
      %43 = dma.done [#allocation6], 2048
    $region25: #{tpu_custom_call.1} parent=1 // pred_fallthru
      _
    %v44 = vld [vmem:[#allocation2] sm:$0xf]
    %v45 = vld [vmem:[#allocation5] sm:$0xff]
    %v46 = vld [vmem:[#allocation5 + $0x8] sm:$0xff]
    %v47 = vld [vmem:[#allocation5 + $0x10] sm:$0xff]
    %v48 = vld [vmem:[#allocation5 + $0x18] sm:$0xff]
    %v49 = vld [vmem:[#allocation5 + $0x20] sm:$0xff]
    %v50 = vld [vmem:[#allocation5 + $0x28] sm:$0xff]
    %v51 = vld [vmem:[#allocation5 + $0x30] sm:$0xff]
    %v52 = vld [vmem:[#allocation5 + $0x38] sm:$0xff]
    %v53 = vld [vmem:[#allocation5 + $0x40] sm:$0xff]
    %v54 = vld [vmem:[#allocation5 + $0x48] sm:$0xff]
    %v55 = vld [vmem:[#allocation5 + $0x50] sm:$0xff]
    %v56 = vld [vmem:[#allocation5 + $0x58] sm:$0xff]
    %v57 = vld [vmem:[#allocation5 + $0x60] sm:$0xff]
    %v58 = vld [vmem:[#allocation5 + $0x68] sm:$0xff]
    %v59 = vld [vmem:[#allocation5 + $0x70] sm:$0xff]
    %v60 = vld [vmem:[#allocation5 + $0x78] sm:$0xff]
    %61 = vmatprep.subr.mxu0 0.0
    %62 = vmatpush1.msra.mxu0 %v45
    %63 = vmatprep.subr.mxu0 0.0
    %64 = vmatpush1.msra.mxu0 %v46
    %65 = vmatprep.subr.mxu0 0.0
    %66 = vmatpush1.msra.mxu0 %v47
    %67 = vmatprep.subr.mxu0 0.0
    %68 = vmatpush1.msra.mxu0 %v48
    %69 = vmatprep.subr.mxu0 0.0
    %70 = vmatpush1.msra.mxu0 %v49
    %71 = vmatprep.subr.mxu0 0.0
    %72 = vmatpush1.msra.mxu0 %v50
    %73 = vmatprep.subr.mxu0 0.0
    %74 = vmatpush1.msra.mxu0 %v51
    %75 = vmatprep.subr.mxu0 0.0
    %76 = vmatpush1.msra.mxu0 %v52
    %77 = vmatprep.subr.mxu0 0.0
    %78 = vmatpush1.msra.mxu0 %v53
    %79 = vmatprep.subr.mxu0 0.0
    %80 = vmatpush1.msra.mxu0 %v54
    %81 = vmatprep.subr.mxu0 0.0
    %82 = vmatpush1.msra.mxu0 %v55
    %83 = vmatprep.subr.mxu0 0.0
    %84 = vmatpush1.msra.mxu0 %v56
    %85 = vmatprep.subr.mxu0 0.0
    %86 = vmatpush1.msra.mxu0 %v57
    %87 = vmatprep.subr.mxu0 0.0
    %88 = vmatpush1.msra.mxu0 %v58
    %89 = vmatprep.subr.mxu0 0.0
    %90 = vmatpush1.msra.mxu0 %v59
    %91 = vmatprep.subr.mxu0 0.0
    %92 = vmatpush1.msra.mxu0 %v60
    %93 = vmatprep.subr.mxu0 0.0
    %94 = vmatpush1.msra.mxu0 0.0
    %95 = vmatprep.subr.mxu0 0.0
    %96 = vmatpush1.msra.mxu0 0.0
    %97 = vmatprep.subr.mxu0 0.0
    %98 = vmatpush1.msra.mxu0 0.0
    %99 = vmatprep.subr.mxu0 0.0
    %100 = vmatpush1.msra.mxu0 0.0
    %101 = vmatprep.subr.mxu0 0.0
    %102 = vmatpush1.msra.mxu0 0.0
    %103 = vmatprep.subr.mxu0 0.0
    %104 = vmatpush1.msra.mxu0 0.0
    %105 = vmatprep.subr.mxu0 0.0
    %106 = vmatpush1.msra.mxu0 0.0
    %107 = vmatprep.subr.mxu0 0.0
    %108 = vmatpush1.msra.mxu0 0.0
    %109 = vmatprep.subr.mxu0 0.0
    %110 = vmatpush1.msra.mxu0 0.0
    %111 = vmatprep.subr.mxu0 0.0
    %112 = vmatpush1.msra.mxu0 0.0
    %113 = vmatprep.subr.mxu0 0.0
    %114 = vmatpush1.msra.mxu0 0.0
    %115 = vmatprep.subr.mxu0 0.0
    %116 = vmatpush1.msra.mxu0 0.0
    %117 = vmatprep.subr.mxu0 0.0
    %118 = vmatpush1.msra.mxu0 0.0
    %119 = vmatprep.subr.mxu0 0.0
    %120 = vmatpush1.msra.mxu0 0.0
    %121 = vmatprep.subr.mxu0 0.0
    %122 = vmatpush1.msra.mxu0 0.0
    %123 = vmatprep.subr.mxu0 0.0
    %124 = vmatpush1.msra.mxu0 0.0
    %125 = vmatprep.mubr.f32.mxu0 0.0
    %126 = vmatmul.mubr.f32.gmra.mrb[0].mxu0 %v44
    %v127 = vpop.f32.mrb[0].mxu0
    %v128 = vadd.f32 0.0, %v127
    %v129 = vpop.f32.mrb[0].mxu0
    %130 = vdwg.mxu0
    %v131 = vrcp.pop 32.0
    %v132 = vmul.f32 %v128, %v131
    %v133 = vsub.f32 %v44, %v132
    %v134 = vmul.f32 %v133, %v133
    %135 = vmatprep.subr.mxu0 0.0
    %136 = vmatpush1.msra.mxu0 %v45
    %137 = vmatprep.subr.mxu0 0.0
    %138 = vmatpush1.msra.mxu0 %v46
    %139 = vmatprep.subr.mxu0 0.0
    %140 = vmatpush1.msra.mxu0 %v47
    %141 = vmatprep.subr.mxu0 0.0
    %142 = vmatpush1.msra.mxu0 %v48
    %143 = vmatprep.subr.mxu0 0.0
    %144 = vmatpush1.msra.mxu0 %v49
    %145 = vmatprep.subr.mxu0 0.0
    %146 = vmatpush1.msra.mxu0 %v50
    %147 = vmatprep.subr.mxu0 0.0
    %148 = vmatpush1.msra.mxu0 %v51
    %149 = vmatprep.subr.mxu0 0.0
    %150 = vmatpush1.msra.mxu0 %v52
    %151 = vmatprep.subr.mxu0 0.0
    %152 = vmatpush1.msra.mxu0 %v53
    %153 = vmatprep.subr.mxu0 0.0
    %154 = vmatpush1.msra.mxu0 %v54
    %155 = vmatprep.subr.mxu0 0.0
    %156 = vmatpush1.msra.mxu0 %v55
    %157 = vmatprep.subr.mxu0 0.0
    %158 = vmatpush1.msra.mxu0 %v56
    %159 = vmatprep.subr.mxu0 0.0
    %160 = vmatpush1.msra.mxu0 %v57
    %161 = vmatprep.subr.mxu0 0.0
    %162 = vmatpush1.msra.mxu0 %v58
    %163 = vmatprep.subr.mxu0 0.0
    %164 = vmatpush1.msra.mxu0 %v59
    %165 = vmatprep.subr.mxu0 0.0
    %166 = vmatpush1.msra.mxu0 %v60
    %167 = vmatprep.subr.mxu0 0.0
    %168 = vmatpush1.msra.mxu0 0.0
    %169 = vmatprep.subr.mxu0 0.0
    %170 = vmatpush1.msra.mxu0 0.0
    %171 = vmatprep.subr.mxu0 0.0
    %172 = vmatpush1.msra.mxu0 0.0
    %173 = vmatprep.subr.mxu0 0.0
    %174 = vmatpush1.msra.mxu0 0.0
    %175 = vmatprep.subr.mxu0 0.0
    %176 = vmatpush1.msra.mxu0 0.0
    %177 = vmatprep.subr.mxu0 0.0
    %178 = vmatpush1.msra.mxu0 0.0
    %179 = vmatprep.subr.mxu0 0.0
    %180 = vmatpush1.msra.mxu0 0.0
    %181 = vmatprep.subr.mxu0 0.0
    %182 = vmatpush1.msra.mxu0 0.0
    %183 = vmatprep.subr.mxu0 0.0
    %184 = vmatpush1.msra.mxu0 0.0
    %185 = vmatprep.subr.mxu0 0.0
    %186 = vmatpush1.msra.mxu0 0.0
    %187 = vmatprep.subr.mxu0 0.0
    %188 = vmatpush1.msra.mxu0 0.0
    %189 = vmatprep.subr.mxu0 0.0
    %190 = vmatpush1.msra.mxu0 0.0
    %191 = vmatprep.subr.mxu0 0.0
    %192 = vmatpush1.msra.mxu0 0.0
    %193 = vmatprep.subr.mxu0 0.0
    %194 = vmatpush1.msra.mxu0 0.0
    %195 = vmatprep.subr.mxu0 0.0
    %196 = vmatpush1.msra.mxu0 0.0
    %197 = vmatprep.subr.mxu0 0.0
    %198 = vmatpush1.msra.mxu0 0.0
    %199 = vmatprep.mubr.f32.mxu0 0.0
    %200 = vmatmul.mubr.f32.gmra.mrb[0].mxu0 %v134
    %v201 = vpop.f32.mrb[0].mxu0
    %v202 = vadd.f32 0.0, %v201
    %v203 = vpop.f32.mrb[0].mxu0
    %204 = vdwg.mxu0
    %v205 = vrcp.pop 31.0
    %v206 = vmul.f32 %v202, %v205
    %v207 = vrsqrt.pop %v206
    %v208 = vmul.f32 %v206, %v207
    %vm209 = vcmp.eq.f32.partialorder %v206, inf
    %v210 = vsel %vm209, %v206, %v208
    %vm211 = vcmp.eq.f32.partialorder %v206, 0.0
    %v212 = vand.u32 %v206, 2147483648
    %v213 = vsel %vm211, %v212, %v210
    %v214 = vadd.f32 %v213, 1e-06
    %v215 = vrcp.pop %v214
    %v216 = vmul.f32 %v133, %v215
    %v217 = vld [vmem:[%s1] sm:$0x1]
    %v219 = vlaneseq
    %v220 = vshrl.u32 %v219, 7
    %v221 = vsub.s32 0, %v220
    %v222 = vrot.slane %v217, %v221
    %v224 = vmul.f32 %v216, %v222
    %v225 = vld [vmem:[%s2] sm:$0x1]
    %v227 = vlaneseq
    %v228 = vshrl.u32 %v227, 7
    %v229 = vsub.s32 0, %v228
    %v230 = vrot.slane %v225, %v229
    %v232 = vadd.f32 %v224, %v230
    %233 = vst [vmem:[#allocation7] sm:$0xf] %v232
    // Predicated region
    $region26: #{tpu_custom_call.1} parent=1 // pred_check
      _
    $region27: #{tpu_custom_call.1} parent=1 // pred_check_branch
      %235 = sbr.rel (0) target = $region29
    $region28: #{tpu_custom_call.1} parent=1 // pred_region
      %s237 = ssub.s32 64, 64
      %238 = vsyncadd [#allocation4], %s237
      %s240 = sshll.u32 [#allocation7], 4
      %s241 = int_to_ptr.vmem [resolvable:$true] %s240
      %243 = dma.vmem_to_hbm [thread:$0]  %s241, 64, %s4, [#allocation4]
    $region29: #{tpu_custom_call.1} parent=1 // pred_fallthru
      _
    // Predicated region
    $region30: #{tpu_custom_call.1} parent=1 // pred_check
      _
    $region31: #{tpu_custom_call.1} parent=1 // pred_check_branch
      %245 = sbr.rel (0) target = $region33
    $region32: #{tpu_custom_call.1} parent=1 // pred_region
      %246 = dma.done [#allocation4], 64
    $region33: #{tpu_custom_call.1} parent=1 // pred_fallthru
      _
    %247 = vsyncpa [#allocation3], 1
    %248 = vsyncpa [#allocation6], 1
    %249 = vsyncpa [#allocation4], 1

</llo_original>
